<compile_context>
chip_gen: v7x
topology: tpu7x:2x2x1
jax: 0.10.0
libtpu: 0.0.40
codegen_flags: <defaults>
</compile_context>

<pallas_src>
import jax
import jax.numpy as jnp
from jax.experimental import pallas as pl
from jax.experimental.pallas import tpu as pltpu


def _l_spa_kernel(org_ref, enh_ref, out_ref):
    hi = pl.program_id(1)
    n_h = pl.num_programs(1)

    bt, c, th, w = org_ref.shape
    _, _, h4, w4 = out_ref.shape
    th4 = th // 4

    # Zero the resident output block at the start of each batch tile; it is
    # reused as the accumulator for the pooled channel-mean difference.
    @pl.when(hi == 0)
    def _():
        out_ref[...] = jnp.zeros_like(out_ref)

    # ---- pooling operators built in-kernel (no constant DMA streams) -----
    # ph[r, col] = 1/4  iff  r == hi*th4 + col//4   (H-direction 4-avg)
    r_h = jax.lax.broadcasted_iota(jnp.int32, (h4, th), 0)
    c_h = jax.lax.broadcasted_iota(jnp.int32, (h4, th), 1)
    base_h = (r_h - hi * th4) * 4
    ph = jnp.where((c_h >= base_h) & (c_h < base_h + 4),
                   0.25, 0.0).astype(jnp.float32)                  # (h4, th)
    # pwt[row, q] = 1/4  iff  row//4 == q              (W-direction 4-avg)
    r_w = jax.lax.broadcasted_iota(jnp.int32, (w, w4), 0)
    c_w = jax.lax.broadcasted_iota(jnp.int32, (w, w4), 1)
    base_w = c_w * 4
    pwt = jnp.where((r_w >= base_w) & (r_w < base_w + 4),
                    0.25, 0.0).astype(jnp.float32)                 # (w, w4)

    for bb in range(bt):  # static unroll, bt is small
        # channel mean of the difference (mean/pool/diff all linear)
        diff = jnp.mean(org_ref[bb].astype(jnp.float32)
                        - enh_ref[bb].astype(jnp.float32), axis=0)  # (th, w)
        pooled = jnp.dot(
            jnp.dot(ph, diff, preferred_element_type=jnp.float32),
            pwt, preferred_element_type=jnp.float32)                # (h4, w4)
        out_ref[bb, 0] = out_ref[bb, 0] + pooled

    # ---- finalize: 3x3 zero-padded difference stencil on pooled diff -----
    @pl.when(hi == n_h - 1)
    def _():
        r1 = jax.lax.broadcasted_iota(jnp.int32, (w4, w4), 0)
        c1 = jax.lax.broadcasted_iota(jnp.int32, (w4, w4), 1)
        sl = jnp.where(r1 + 1 == c1, 1.0, 0.0).astype(jnp.float32)  # (d@sl)[i,j]=d[i,j-1]
        sr = jnp.where(r1 == c1 + 1, 1.0, 0.0).astype(jnp.float32)  # (d@sr)[i,j]=d[i,j+1]
        r2 = jax.lax.broadcasted_iota(jnp.int32, (h4, h4), 0)
        c2 = jax.lax.broadcasted_iota(jnp.int32, (h4, h4), 1)
        su = jnp.where(r2 == c2 + 1, 1.0, 0.0).astype(jnp.float32)  # (su@d)[i,j]=d[i-1,j]
        sd = jnp.where(r2 + 1 == c2, 1.0, 0.0).astype(jnp.float32)  # (sd@d)[i,j]=d[i+1,j]
        for bb in range(bt):
            d = out_ref[bb, 0]                                       # (h4, w4)
            d_left = d - jnp.dot(d, sl, preferred_element_type=jnp.float32)
            d_right = d - jnp.dot(d, sr, preferred_element_type=jnp.float32)
            d_up = d - jnp.dot(su, d, preferred_element_type=jnp.float32)
            d_down = d - jnp.dot(sd, d, preferred_element_type=jnp.float32)
            out_ref[bb, 0] = (d_left * d_left + d_right * d_right
                              + d_up * d_up + d_down * d_down)


def l_spa_pallas(org, enhance, *, max_block_bytes=2 * 1024 * 1024):
    """L_spa forward. Accepts f32 or bf16 NCHW inputs; computes in f32."""
    assert org.shape == enhance.shape
    b, c, h, w = org.shape
    assert h % 4 == 0 and w % 4 == 0, "AvgPool2d(4) requires H, W divisible by 4"
    h4, w4 = h // 4, w // 4
    itemsize = jnp.dtype(org.dtype).itemsize

    # Largest H tile (multiple of 4, divides H) within the per-block budget.
    th = 4
    for cand in range(4, h + 1, 4):
        if h % cand == 0 and c * cand * w * itemsize <= max_block_bytes:
            th = cand
    # Largest batch tile (divides b) within the per-block budget.
    bt = 1
    for cand in range(1, b + 1):
        if b % cand == 0 and cand * c * th * w * itemsize <= max_block_bytes:
            bt = cand

    grid = (b // bt, h // th)
    in_spec = pl.BlockSpec((bt, c, th, w), lambda bi, hi: (bi, 0, hi, 0))

    return pl.pallas_call(
        _l_spa_kernel,
        out_shape=jax.ShapeDtypeStruct((b, 1, h4, w4), jnp.float32),
        grid_spec=pltpu.PrefetchScalarGridSpec(
            num_scalar_prefetch=0,
            grid=grid,
            in_specs=[in_spec, in_spec],
            out_specs=pl.BlockSpec((bt, 1, h4, w4), lambda bi, hi: (bi, 0, 0, 0)),
        ),
        compiler_params=pltpu.CompilerParams(
            dimension_semantics=("parallel", "arbitrary"),
            vmem_limit_bytes=32 * 1024 * 1024,
        ),
    )(org, enhance)


def l_spa_reference(org, enhance):
    """Pure-JAX reference replicating the PyTorch forward exactly (f32)."""
    om = jnp.mean(org.astype(jnp.float32), axis=1, keepdims=True)
    em = jnp.mean(enhance.astype(jnp.float32), axis=1, keepdims=True)

    def pool(x):
        bb, _, hh, ww = x.shape
        return x.reshape(bb, 1, hh // 4, 4, ww // 4, 4).mean(axis=(3, 5))

    d = pool(om) - pool(em)
    dp = jnp.pad(d, ((0, 0), (0, 0), (1, 1), (1, 1)))
    d_left = d - dp[:, :, 1:-1, 0:-2]
    d_right = d - dp[:, :, 1:-1, 2:]
    d_up = d - dp[:, :, 0:-2, 1:-1]
    d_down = d - dp[:, :, 2:, 1:-1]
    return d_left**2 + d_right**2 + d_up**2 + d_down**2


if __name__ == "__main__":
    key = jax.random.PRNGKey(0)
    k1, k2 = jax.random.split(key)
    b, c, h, w = 2, 4, 16, 16
    org = jax.random.uniform(k1, (b, c, h, w), dtype=jnp.float32)
    enhance = jax.random.uniform(k2, (b, c, h, w), dtype=jnp.float32)

    ref = l_spa_reference(org, enhance)

    # Default tiling: whole batch + whole image in a single grid step.
    out = jax.block_until_ready(l_spa_pallas(org, enhance))
    assert out.shape == (b, 1, h // 4, w // 4)
    assert jnp.allclose(out, ref, atol=1e-5, rtol=1e-5), "mismatch (default tiling)"

    # Forced small budget: exercises batch tiling + H-tile accumulation path.
    out_tiled = jax.block_until_ready(
        l_spa_pallas(org, enhance, max_block_bytes=c * 8 * w * 4))
    assert jnp.allclose(out_tiled, ref, atol=1e-5, rtol=1e-5), "mismatch (tiled)"

    # bf16 inputs (halves HBM traffic); kernel upcasts to f32 internally.
    org_bf = org.astype(jnp.bfloat16)
    enh_bf = enhance.astype(jnp.bfloat16)
    out_bf = jax.block_until_ready(l_spa_pallas(org_bf, enh_bf))
    ref_bf = l_spa_reference(org_bf, enh_bf)
    assert jnp.allclose(out_bf, ref_bf, atol=1e-5, rtol=1e-5), "mismatch (bf16)"

    print("KERNEL_OK")
</pallas_src>

<mosaic_0001>
module attributes {stable_mosaic.version = 11 : i64} {
  func.func @_l_spa_kernel(%arg0: i32, %arg1: i32, %arg2: memref<2x4x16x16xf32, #tpu.memory_space<vmem>>, %arg3: memref<2x4x16x16xf32, #tpu.memory_space<vmem>>, %arg4: memref<2x1x4x4xf32, #tpu.memory_space<vmem>>) attributes {dimension_semantics = [#tpu.dimension_semantics<parallel>, #tpu.dimension_semantics<arbitrary>], iteration_bounds = array<i64: 1, 1>, scalar_prefetch = 0 : i64, scratch_operands = 0 : i64, tpu.core_type = #tpu.core_type<tc>, window_params = [{transform_indices = @transform_0, window_bounds = array<i64: 2, 4, 16, 16>}, {transform_indices = @transform_1, window_bounds = array<i64: 2, 4, 16, 16>}, {transform_indices = @transform_2, window_bounds = array<i64: 2, 1, 4, 4>}]} {
    %c0_i32 = arith.constant 0 : i32
    %0 = arith.cmpi eq, %arg1, %c0_i32 : i32
    %1 = arith.extui %0 : i1 to i32
    %c0_i32_0 = arith.constant 0 : i32
    %2 = arith.cmpi ne, %1, %c0_i32_0 : i32
    scf.if %2 {
      %cst_48 = arith.constant 0.000000e+00 : f32
      %65 = vector.broadcast %cst_48 : f32 to vector<2x1x4x4xf32>
      %c0_49 = arith.constant 0 : index
      %c0_50 = arith.constant 0 : index
      %c0_51 = arith.constant 0 : index
      %c0_52 = arith.constant 0 : index
      %66 = vector.load %arg4[%c0_49, %c0_50, %c0_51, %c0_52] : memref<2x1x4x4xf32, #tpu.memory_space<vmem>>, vector<2x1x4x4xf32>
      tpu.vector_store %arg4[%c0_49, %c0_50, %c0_51, %c0_52], %65 {strides = array<i32>} : memref<2x1x4x4xf32, #tpu.memory_space<vmem>>, vector<2x1x4x4xf32>,
    } else {
    }
    %3 = tpu.iota {dimensions = array<i32: 0>} : vector<4x16xi32>
    %4 = tpu.iota {dimensions = array<i32: 1>} : vector<4x16xi32>
    %c4_i32 = arith.constant 4 : i32
    %5 = arith.muli %arg1, %c4_i32 : i32
    %6 = vector.broadcast %5 : i32 to vector<4x16xi32>
    %7 = arith.subi %3, %6 : vector<4x16xi32>
    %c4_i32_1 = arith.constant 4 : i32
    %8 = vector.broadcast %c4_i32_1 : i32 to vector<4x16xi32>
    %9 = arith.muli %7, %8 : vector<4x16xi32>
    %10 = arith.cmpi sge, %4, %9 : vector<4x16xi32>
    %c4_i32_2 = arith.constant 4 : i32
    %11 = vector.broadcast %c4_i32_2 : i32 to vector<4x16xi32>
    %12 = arith.addi %9, %11 : vector<4x16xi32>
    %13 = arith.cmpi slt, %4, %12 : vector<4x16xi32>
    %14 = arith.andi %10, %13 : vector<4x16xi1>
    %cst = arith.constant 2.500000e-01 : f32
    %cst_3 = arith.constant 0.000000e+00 : f32
    %15 = vector.broadcast %cst : f32 to vector<4x16xf32>
    %16 = vector.broadcast %cst_3 : f32 to vector<4x16xf32>
    %17 = arith.select %14, %15, %16 : vector<4x16xi1>, vector<4x16xf32>
    %18 = tpu.iota {dimensions = array<i32: 0>} : vector<16x4xi32>
    %19 = tpu.iota {dimensions = array<i32: 1>} : vector<16x4xi32>
    %c4_i32_4 = arith.constant 4 : i32
    %20 = vector.broadcast %c4_i32_4 : i32 to vector<16x4xi32>
    %21 = arith.muli %19, %20 : vector<16x4xi32>
    %22 = arith.cmpi sge, %18, %21 : vector<16x4xi32>
    %c4_i32_5 = arith.constant 4 : i32
    %23 = vector.broadcast %c4_i32_5 : i32 to vector<16x4xi32>
    %24 = arith.addi %21, %23 : vector<16x4xi32>
    %25 = arith.cmpi slt, %18, %24 : vector<16x4xi32>
    %26 = arith.andi %22, %25 : vector<16x4xi1>
    %cst_6 = arith.constant 2.500000e-01 : f32
    %cst_7 = arith.constant 0.000000e+00 : f32
    %27 = vector.broadcast %cst_6 : f32 to vector<16x4xf32>
    %28 = vector.broadcast %cst_7 : f32 to vector<16x4xf32>
    %29 = arith.select %26, %27, %28 : vector<16x4xi1>, vector<16x4xf32>
    %c0 = arith.constant 0 : index
    %c0_8 = arith.constant 0 : index
    %c0_9 = arith.constant 0 : index
    %c0_10 = arith.constant 0 : index
    %30 = vector.load %arg2[%c0, %c0_8, %c0_9, %c0_10] : memref<2x4x16x16xf32, #tpu.memory_space<vmem>>, vector<1x4x16x16xf32>
    %31 = vector.shape_cast %30 : vector<1x4x16x16xf32> to vector<4x16x16xf32>
    %c0_11 = arith.constant 0 : index
    %c0_12 = arith.constant 0 : index
    %c0_13 = arith.constant 0 : index
    %c0_14 = arith.constant 0 : index
    %32 = vector.load %arg3[%c0_11, %c0_12, %c0_13, %c0_14] : memref<2x4x16x16xf32, #tpu.memory_space<vmem>>, vector<1x4x16x16xf32>
    %33 = vector.shape_cast %32 : vector<1x4x16x16xf32> to vector<4x16x16xf32>
    %34 = arith.subf %31, %33 : vector<4x16x16xf32>
    %cst_15 = arith.constant dense<0.000000e+00> : vector<16x16xf32>
    %35 = vector.multi_reduction <add>, %34, %cst_15 [0] : vector<4x16x16xf32> to vector<16x16xf32>
    %cst_16 = arith.constant 4.000000e+00 : f32
    %36 = vector.broadcast %cst_16 : f32 to vector<16x16xf32>
    %37 = arith.divf %35, %36 : vector<16x16xf32>
    %cst_17 = arith.constant dense<0.000000e+00> : vector<4x16xf32>
    %38 = tpu.matmul %17, %37, %cst_17 {dimension_numbers = #tpu.dot_dimension_numbers<[1], [0], [0], [1], [0, 0, 1, 1], [], []>} : vector<4x16xf32>, vector<16x16xf32>, vector<4x16xf32> -> vector<4x16xf32>
    %cst_18 = arith.constant dense<0.000000e+00> : vector<4x4xf32>
    %39 = tpu.matmul %38, %29, %cst_18 {dimension_numbers = #tpu.dot_dimension_numbers<[1], [0], [0], [1], [0, 0, 1, 1], [], []>} : vector<4x16xf32>, vector<16x4xf32>, vector<4x4xf32> -> vector<4x4xf32>
    %c0_19 = arith.constant 0 : index
    %c0_20 = arith.constant 0 : index
    %c0_21 = arith.constant 0 : index
    %c0_22 = arith.constant 0 : index
    %40 = vector.load %arg4[%c0_19, %c0_20, %c0_21, %c0_22] : memref<2x1x4x4xf32, #tpu.memory_space<vmem>>, vector<1x1x4x4xf32>
    %41 = vector.shape_cast %40 : vector<1x1x4x4xf32> to vector<4x4xf32>
    %42 = arith.addf %41, %39 : vector<4x4xf32>
    %c0_23 = arith.constant 0 : index
    %c0_24 = arith.constant 0 : index
    %c0_25 = arith.constant 0 : index
    %c0_26 = arith.constant 0 : index
    %43 = vector.load %arg4[%c0_23, %c0_24, %c0_25, %c0_26] : memref<2x1x4x4xf32, #tpu.memory_space<vmem>>, vector<1x1x4x4xf32>
    %44 = vector.shape_cast %43 : vector<1x1x4x4xf32> to vector<4x4xf32>
    %45 = vector.shape_cast %42 : vector<4x4xf32> to vector<1x1x4x4xf32>
    tpu.vector_store %arg4[%c0_23, %c0_24, %c0_25, %c0_26], %45 {strides = array<i32>} : memref<2x1x4x4xf32, #tpu.memory_space<vmem>>, vector<1x1x4x4xf32>,
    %c1 = arith.constant 1 : index
    %c0_27 = arith.constant 0 : index
    %c0_28 = arith.constant 0 : index
    %c0_29 = arith.constant 0 : index
    %46 = vector.load %arg2[%c1, %c0_27, %c0_28, %c0_29] : memref<2x4x16x16xf32, #tpu.memory_space<vmem>>, vector<1x4x16x16xf32>
    %47 = vector.shape_cast %46 : vector<1x4x16x16xf32> to vector<4x16x16xf32>
    %c1_30 = arith.constant 1 : index
    %c0_31 = arith.constant 0 : index
    %c0_32 = arith.constant 0 : index
    %c0_33 = arith.constant 0 : index
    %48 = vector.load %arg3[%c1_30, %c0_31, %c0_32, %c0_33] : memref<2x4x16x16xf32, #tpu.memory_space<vmem>>, vector<1x4x16x16xf32>
    %49 = vector.shape_cast %48 : vector<1x4x16x16xf32> to vector<4x16x16xf32>
    %50 = arith.subf %47, %49 : vector<4x16x16xf32>
    %cst_34 = arith.constant dense<0.000000e+00> : vector<16x16xf32>
    %51 = vector.multi_reduction <add>, %50, %cst_34 [0] : vector<4x16x16xf32> to vector<16x16xf32>
    %cst_35 = arith.constant 4.000000e+00 : f32
    %52 = vector.broadcast %cst_35 : f32 to vector<16x16xf32>
    %53 = arith.divf %51, %52 : vector<16x16xf32>
    %cst_36 = arith.constant dense<0.000000e+00> : vector<4x16xf32>
    %54 = tpu.matmul %17, %53, %cst_36 {dimension_numbers = #tpu.dot_dimension_numbers<[1], [0], [0], [1], [0, 0, 1, 1], [], []>} : vector<4x16xf32>, vector<16x16xf32>, vector<4x16xf32> -> vector<4x16xf32>
    %cst_37 = arith.constant dense<0.000000e+00> : vector<4x4xf32>
    %55 = tpu.matmul %54, %29, %cst_37 {dimension_numbers = #tpu.dot_dimension_numbers<[1], [0], [0], [1], [0, 0, 1, 1], [], []>} : vector<4x16xf32>, vector<16x4xf32>, vector<4x4xf32> -> vector<4x4xf32>
    %c1_38 = arith.constant 1 : index
    %c0_39 = arith.constant 0 : index
    %c0_40 = arith.constant 0 : index
    %c0_41 = arith.constant 0 : index
    %56 = vector.load %arg4[%c1_38, %c0_39, %c0_40, %c0_41] : memref<2x1x4x4xf32, #tpu.memory_space<vmem>>, vector<1x1x4x4xf32>
    %57 = vector.shape_cast %56 : vector<1x1x4x4xf32> to vector<4x4xf32>
    %58 = arith.addf %57, %55 : vector<4x4xf32>
    %c1_42 = arith.constant 1 : index
    %c0_43 = arith.constant 0 : index
    %c0_44 = arith.constant 0 : index
    %c0_45 = arith.constant 0 : index
    %59 = vector.load %arg4[%c1_42, %c0_43, %c0_44, %c0_45] : memref<2x1x4x4xf32, #tpu.memory_space<vmem>>, vector<1x1x4x4xf32>
    %60 = vector.shape_cast %59 : vector<1x1x4x4xf32> to vector<4x4xf32>
    %61 = vector.shape_cast %58 : vector<4x4xf32> to vector<1x1x4x4xf32>
    tpu.vector_store %arg4[%c1_42, %c0_43, %c0_44, %c0_45], %61 {strides = array<i32>} : memref<2x1x4x4xf32, #tpu.memory_space<vmem>>, vector<1x1x4x4xf32>,
    %c0_i32_46 = arith.constant 0 : i32
    %62 = arith.cmpi eq, %arg1, %c0_i32_46 : i32
    %63 = arith.extui %62 : i1 to i32
    %c0_i32_47 = arith.constant 0 : i32
    %64 = arith.cmpi ne, %63, %c0_i32_47 : i32
    scf.if %64 {
      %65 = tpu.iota {dimensions = array<i32: 0>} : vector<4x4xi32>
      %66 = tpu.iota {dimensions = array<i32: 1>} : vector<4x4xi32>
      %c1_i32 = arith.constant 1 : i32
      %67 = vector.broadcast %c1_i32 : i32 to vector<4x4xi32>
      %68 = arith.addi %65, %67 : vector<4x4xi32>
      %69 = arith.cmpi eq, %68, %66 : vector<4x4xi32>
      %cst_48 = arith.constant 1.000000e+00 : f32
      %cst_49 = arith.constant 0.000000e+00 : f32
      %70 = vector.broadcast %cst_48 : f32 to vector<4x4xf32>
      %71 = vector.broadcast %cst_49 : f32 to vector<4x4xf32>
      %72 = arith.select %69, %70, %71 : vector<4x4xi1>, vector<4x4xf32>
      %c1_i32_50 = arith.constant 1 : i32
      %73 = vector.broadcast %c1_i32_50 : i32 to vector<4x4xi32>
      %74 = arith.addi %66, %73 : vector<4x4xi32>
      %75 = arith.cmpi eq, %65, %74 : vector<4x4xi32>
      %cst_51 = arith.constant 1.000000e+00 : f32
      %cst_52 = arith.constant 0.000000e+00 : f32
      %76 = vector.broadcast %cst_51 : f32 to vector<4x4xf32>
      %77 = vector.broadcast %cst_52 : f32 to vector<4x4xf32>
      %78 = arith.select %75, %76, %77 : vector<4x4xi1>, vector<4x4xf32>
      %79 = tpu.iota {dimensions = array<i32: 0>} : vector<4x4xi32>
      %80 = tpu.iota {dimensions = array<i32: 1>} : vector<4x4xi32>
      %c1_i32_53 = arith.constant 1 : i32
      %81 = vector.broadcast %c1_i32_53 : i32 to vector<4x4xi32>
      %82 = arith.addi %80, %81 : vector<4x4xi32>
      %83 = arith.cmpi eq, %79, %82 : vector<4x4xi32>
      %cst_54 = arith.constant 1.000000e+00 : f32
      %cst_55 = arith.constant 0.000000e+00 : f32
      %84 = vector.broadcast %cst_54 : f32 to vector<4x4xf32>
      %85 = vector.broadcast %cst_55 : f32 to vector<4x4xf32>
      %86 = arith.select %83, %84, %85 : vector<4x4xi1>, vector<4x4xf32>
      %c1_i32_56 = arith.constant 1 : i32
      %87 = vector.broadcast %c1_i32_56 : i32 to vector<4x4xi32>
      %88 = arith.addi %79, %87 : vector<4x4xi32>
      %89 = arith.cmpi eq, %88, %80 : vector<4x4xi32>
      %cst_57 = arith.constant 1.000000e+00 : f32
      %cst_58 = arith.constant 0.000000e+00 : f32
      %90 = vector.broadcast %cst_57 : f32 to vector<4x4xf32>
      %91 = vector.broadcast %cst_58 : f32 to vector<4x4xf32>
      %92 = arith.select %89, %90, %91 : vector<4x4xi1>, vector<4x4xf32>
      %c0_59 = arith.constant 0 : index
      %c0_60 = arith.constant 0 : index
      %c0_61 = arith.constant 0 : index
      %c0_62 = arith.constant 0 : index
      %93 = vector.load %arg4[%c0_59, %c0_60, %c0_61, %c0_62] : memref<2x1x4x4xf32, #tpu.memory_space<vmem>>, vector<1x1x4x4xf32>
      %94 = vector.shape_cast %93 : vector<1x1x4x4xf32> to vector<4x4xf32>
      %cst_63 = arith.constant dense<0.000000e+00> : vector<4x4xf32>
      %95 = tpu.matmul %94, %72, %cst_63 {dimension_numbers = #tpu.dot_dimension_numbers<[1], [0], [0], [1], [0, 0, 1, 1], [], []>} : vector<4x4xf32>, vector<4x4xf32>, vector<4x4xf32> -> vector<4x4xf32>
      %96 = arith.subf %94, %95 : vector<4x4xf32>
      %cst_64 = arith.constant dense<0.000000e+00> : vector<4x4xf32>
      %97 = tpu.matmul %94, %78, %cst_64 {dimension_numbers = #tpu.dot_dimension_numbers<[1], [0], [0], [1], [0, 0, 1, 1], [], []>} : vector<4x4xf32>, vector<4x4xf32>, vector<4x4xf32> -> vector<4x4xf32>
      %98 = arith.subf %94, %97 : vector<4x4xf32>
      %cst_65 = arith.constant dense<0.000000e+00> : vector<4x4xf32>
      %99 = tpu.matmul %86, %94, %cst_65 {dimension_numbers = #tpu.dot_dimension_numbers<[1], [0], [0], [1], [0, 0, 1, 1], [], []>} : vector<4x4xf32>, vector<4x4xf32>, vector<4x4xf32> -> vector<4x4xf32>
      %100 = arith.subf %94, %99 : vector<4x4xf32>
      %cst_66 = arith.constant dense<0.000000e+00> : vector<4x4xf32>
      %101 = tpu.matmul %92, %94, %cst_66 {dimension_numbers = #tpu.dot_dimension_numbers<[1], [0], [0], [1], [0, 0, 1, 1], [], []>} : vector<4x4xf32>, vector<4x4xf32>, vector<4x4xf32> -> vector<4x4xf32>
      %102 = arith.subf %94, %101 : vector<4x4xf32>
      %103 = arith.mulf %96, %96 : vector<4x4xf32>
      %104 = arith.mulf %98, %98 : vector<4x4xf32>
      %105 = arith.addf %103, %104 : vector<4x4xf32>
      %106 = arith.mulf %100, %100 : vector<4x4xf32>
      %107 = arith.addf %105, %106 : vector<4x4xf32>
      %108 = arith.mulf %102, %102 : vector<4x4xf32>
      %109 = arith.addf %107, %108 : vector<4x4xf32>
      %c0_67 = arith.constant 0 : index
      %c0_68 = arith.constant 0 : index
      %c0_69 = arith.constant 0 : index
      %c0_70 = arith.constant 0 : index
      %110 = vector.load %arg4[%c0_67, %c0_68, %c0_69, %c0_70] : memref<2x1x4x4xf32, #tpu.memory_space<vmem>>, vector<1x1x4x4xf32>
      %111 = vector.shape_cast %110 : vector<1x1x4x4xf32> to vector<4x4xf32>
      %112 = vector.shape_cast %109 : vector<4x4xf32> to vector<1x1x4x4xf32>
      tpu.vector_store %arg4[%c0_67, %c0_68, %c0_69, %c0_70], %112 {strides = array<i32>} : memref<2x1x4x4xf32, #tpu.memory_space<vmem>>, vector<1x1x4x4xf32>,
      %c1_71 = arith.constant 1 : index
      %c0_72 = arith.constant 0 : index
      %c0_73 = arith.constant 0 : index
      %c0_74 = arith.constant 0 : index
      %113 = vector.load %arg4[%c1_71, %c0_72, %c0_73, %c0_74] : memref<2x1x4x4xf32, #tpu.memory_space<vmem>>, vector<1x1x4x4xf32>
      %114 = vector.shape_cast %113 : vector<1x1x4x4xf32> to vector<4x4xf32>
      %cst_75 = arith.constant dense<0.000000e+00> : vector<4x4xf32>
      %115 = tpu.matmul %114, %72, %cst_75 {dimension_numbers = #tpu.dot_dimension_numbers<[1], [0], [0], [1], [0, 0, 1, 1], [], []>} : vector<4x4xf32>, vector<4x4xf32>, vector<4x4xf32> -> vector<4x4xf32>
      %116 = arith.subf %114, %115 : vector<4x4xf32>
      %cst_76 = arith.constant dense<0.000000e+00> : vector<4x4xf32>
      %117 = tpu.matmul %114, %78, %cst_76 {dimension_numbers = #tpu.dot_dimension_numbers<[1], [0], [0], [1], [0, 0, 1, 1], [], []>} : vector<4x4xf32>, vector<4x4xf32>, vector<4x4xf32> -> vector<4x4xf32>
      %118 = arith.subf %114, %117 : vector<4x4xf32>
      %cst_77 = arith.constant dense<0.000000e+00> : vector<4x4xf32>
      %119 = tpu.matmul %86, %114, %cst_77 {dimension_numbers = #tpu.dot_dimension_numbers<[1], [0], [0], [1], [0, 0, 1, 1], [], []>} : vector<4x4xf32>, vector<4x4xf32>, vector<4x4xf32> -> vector<4x4xf32>
      %120 = arith.subf %114, %119 : vector<4x4xf32>
      %cst_78 = arith.constant dense<0.000000e+00> : vector<4x4xf32>
      %121 = tpu.matmul %92, %114, %cst_78 {dimension_numbers = #tpu.dot_dimension_numbers<[1], [0], [0], [1], [0, 0, 1, 1], [], []>} : vector<4x4xf32>, vector<4x4xf32>, vector<4x4xf32> -> vector<4x4xf32>
      %122 = arith.subf %114, %121 : vector<4x4xf32>
      %123 = arith.mulf %116, %116 : vector<4x4xf32>
      %124 = arith.mulf %118, %118 : vector<4x4xf32>
      %125 = arith.addf %123, %124 : vector<4x4xf32>
      %126 = arith.mulf %120, %120 : vector<4x4xf32>
      %127 = arith.addf %125, %126 : vector<4x4xf32>
      %128 = arith.mulf %122, %122 : vector<4x4xf32>
      %129 = arith.addf %127, %128 : vector<4x4xf32>
      %c1_79 = arith.constant 1 : index
      %c0_80 = arith.constant 0 : index
      %c0_81 = arith.constant 0 : index
      %c0_82 = arith.constant 0 : index
      %130 = vector.load %arg4[%c1_79, %c0_80, %c0_81, %c0_82] : memref<2x1x4x4xf32, #tpu.memory_space<vmem>>, vector<1x1x4x4xf32>
      %131 = vector.shape_cast %130 : vector<1x1x4x4xf32> to vector<4x4xf32>
      %132 = vector.shape_cast %129 : vector<4x4xf32> to vector<1x1x4x4xf32>
      tpu.vector_store %arg4[%c1_79, %c0_80, %c0_81, %c0_82], %132 {strides = array<i32>} : memref<2x1x4x4xf32, #tpu.memory_space<vmem>>, vector<1x1x4x4xf32>,
    } else {
    }
    return
  }
  func.func @transform_0(%arg0: i32, %arg1: i32) -> (i32, i32, i32, i32) {
    %c0_i32 = arith.constant 0 : i32
    %c0_i32_0 = arith.constant 0 : i32
    %c0_i32_1 = arith.constant 0 : i32
    return %arg0, %c0_i32, %arg1, %c0_i32_0 : i32, i32, i32, i32
  }
  func.func @transform_1(%arg0: i32, %arg1: i32) -> (i32, i32, i32, i32) {
    %c0_i32 = arith.constant 0 : i32
    %c0_i32_0 = arith.constant 0 : i32
    %c0_i32_1 = arith.constant 0 : i32
    return %arg0, %c0_i32, %arg1, %c0_i32_0 : i32, i32, i32, i32
  }
  func.func @transform_2(%arg0: i32, %arg1: i32) -> (i32, i32, i32, i32) {
    %c0_i32 = arith.constant 0 : i32
    %c0_i32_0 = arith.constant 0 : i32
    %c0_i32_1 = arith.constant 0 : i32
    %c0_i32_2 = arith.constant 0 : i32
    return %arg0, %c0_i32, %c0_i32_0, %c0_i32_1 : i32, i32, i32, i32
  }
}

</mosaic_0001>

<llo_original>
// kernel: tpu_custom_call.1
$region0: #{tpu_custom_call.1}
  #allocation0 [shape = 'u32[]', space=smem, size = 0x4, offset = 0x4, fixed_abs, tag = 'smem constant byte address 0x4 - core index']
  #allocation1 [shape = 'u32[144,128]{1,0:T(1,128)}', space=vmem, size = 0x12000, scoped, tag = 'internal scratch']
  %s0 = inlined_call_operand.hbm [shape: f32[2,4,16,16], index: 0, kind: input, shape index: {}]
  %s1 = inlined_call_operand.hbm [shape: f32[2,4,16,16], index: 1, kind: input, shape index: {}]
  %s2 = inlined_call_operand.hbm [shape: f32[2,1,4,4], index: 2, kind: output, shape index: {}]
  %s3 = sld [smem:[#allocation0]]
  $region34: #{tpu_custom_call.1} parent=0
    _
  %s5 = ssub.s32 1, %s3
  %s6 = scalar_select 0, %s5, %s3
  $region1: #{tpu_custom_call.1} parent=0
    #allocation2 [shape = 'u8[65536]{0}', space=vmem, size = 0x10000, scoped, tag = 'input window, operand 0, single buffered']
    #allocation3 [shape = 's32[1]{0}', space=sflag, size = 0x4, scoped, tag = 'scoped memory for tpu_custom_call.1']
    #allocation4 [shape = 's32[1]{0}', space=sflag, size = 0x4, scoped, tag = 'scoped memory for tpu_custom_call.1']
    #allocation5 [shape = 'u8[65536]{0}', space=vmem, size = 0x10000, scoped, tag = 'input window, operand 1, single buffered']
    #allocation6 [shape = 's32[1]{0}', space=sflag, size = 0x4, scoped, tag = 'scoped memory for tpu_custom_call.1']
    #allocation7 [shape = 'u8[4096]{0}', space=vmem, size = 0x1000, scoped, tag = 'output window, operand 0, single buffered']
    %7 = vsyncpa [#allocation3], 0
    %8 = vsyncpa [#allocation6], 0
    %9 = vsyncpa [#allocation4], 0
    // Predicated region
    $region2: #{tpu_custom_call.1} parent=1 // pred_check
      _
    $region3: #{tpu_custom_call.1} parent=1 // pred_check_branch
      %11 = sbr.rel (0) target = $region5
    $region4: #{tpu_custom_call.1} parent=1 // pred_region
      %s13 = ssub.s32 2048, 2048
      %14 = vsyncadd [#allocation3], %s13
      %s15 = sshll.u32 [#allocation2], 4
      %s16 = int_to_ptr.vmem [resolvable:$true] %s15
      %21 = dma.hbm_to_vmem [thread:$0]  %s0, 2048, %s16, [#allocation3], 128, 128, 8
    $region5: #{tpu_custom_call.1} parent=1 // pred_fallthru
      _
    // Predicated region
    $region6: #{tpu_custom_call.1} parent=1 // pred_check
      _
    $region7: #{tpu_custom_call.1} parent=1 // pred_check_branch
      %23 = sbr.rel (0) target = $region9
    $region8: #{tpu_custom_call.1} parent=1 // pred_region
      %s25 = ssub.s32 2048, 2048
      %26 = vsyncadd [#allocation6], %s25
      %s27 = sshll.u32 [#allocation5], 4
      %s28 = int_to_ptr.vmem [resolvable:$true] %s27
      %33 = dma.hbm_to_vmem [thread:$0]  %s1, 2048, %s28, [#allocation6], 128, 128, 8
    $region9: #{tpu_custom_call.1} parent=1 // pred_fallthru
      _
    // Predicated region
    $region10: #{tpu_custom_call.1} parent=1 // pred_check
      _
    $region11: #{tpu_custom_call.1} parent=1 // pred_check_branch
      %35 = sbr.rel (0) target = $region13
    $region12: #{tpu_custom_call.1} parent=1 // pred_region
      %36 = dma.done [#allocation3], 2048
    $region13: #{tpu_custom_call.1} parent=1 // pred_fallthru
      _
    // Predicated region
    $region14: #{tpu_custom_call.1} parent=1 // pred_check
      _
    $region15: #{tpu_custom_call.1} parent=1 // pred_check_branch
      %38 = sbr.rel (0) target = $region17
    $region16: #{tpu_custom_call.1} parent=1 // pred_region
      %39 = dma.done [#allocation6], 2048
    $region17: #{tpu_custom_call.1} parent=1 // pred_fallthru
      _
    %p40 = scmp.eq.s32.totalorder 0, 0
    // Predicated region
    $region18: #{tpu_custom_call.1} parent=1 // pred_check
      %p41 = pneg %p40
    $region19: #{tpu_custom_call.1} parent=1 // pred_check_branch
      %43 = sbr.rel (%p41) target = $region21
    $region20: #{tpu_custom_call.1} parent=1 // pred_region
      %vm44 = vcmask 27648
      %45 = vst.msk [vmem:[#allocation7] sm:$0xf] %vm44, 0.0
      %46 = vst.msk [vmem:[#allocation7 + $0x4] sm:$0xf] %vm44, 0.0
    $region21: #{tpu_custom_call.1} parent=1 // pred_fallthru
      _
    %v47 = vlaneseq
    %v48 = vshrl.u32 %v47, 7
    %v49 = vlaneseq
    %v50 = vand.u32 %v49, 127
    %s51 = smul.u32 0, 4
    %v52 = vstv %s51
    %v53 = vsub.s32 %v48, %v52
    %v54 = vmul.u32 %v53, 4
    %vm55 = vcmp.ge.s32.totalorder %v50, %v54
    %v56 = vadd.s32 %v54, 4
    %vm57 = vcmp.lt.s32.totalorder %v50, %v56
    %vm58 = vmand %vm55, %vm57
    %v59 = vsel %vm58, 0.25, 0.0
    %v60 = vadd.s32 %v48, 8
    %v61 = vmul.u32 %v50, 4
    %vm62 = vcmp.ge.s32.totalorder %v48, %v61
    %vm63 = vcmp.ge.s32.totalorder %v60, %v61
    %v64 = vadd.s32 %v61, 4
    %vm65 = vcmp.lt.s32.totalorder %v48, %v64
    %vm66 = vcmp.lt.s32.totalorder %v60, %v64
    %vm67 = vmand %vm62, %vm65
    %vm68 = vmand %vm63, %vm66
    %v69 = vsel %vm67, 0.25, 0.0
    %v70 = vsel %vm68, 0.25, 0.0
    %v71 = vld [vmem:[#allocation2] sm:$0xff]
    %v72 = vld [vmem:[#allocation2 + $0x8] sm:$0xff]
    %v73 = vld [vmem:[#allocation2 + $0x10] sm:$0xff]
    %v74 = vld [vmem:[#allocation2 + $0x18] sm:$0xff]
    %v75 = vld [vmem:[#allocation2 + $0x20] sm:$0xff]
    %v76 = vld [vmem:[#allocation2 + $0x28] sm:$0xff]
    %v77 = vld [vmem:[#allocation2 + $0x30] sm:$0xff]
    %v78 = vld [vmem:[#allocation2 + $0x38] sm:$0xff]
    %v79 = vld [vmem:[#allocation5] sm:$0xff]
    %v80 = vld [vmem:[#allocation5 + $0x8] sm:$0xff]
    %v81 = vld [vmem:[#allocation5 + $0x10] sm:$0xff]
    %v82 = vld [vmem:[#allocation5 + $0x18] sm:$0xff]
    %v83 = vld [vmem:[#allocation5 + $0x20] sm:$0xff]
    %v84 = vld [vmem:[#allocation5 + $0x28] sm:$0xff]
    %v85 = vld [vmem:[#allocation5 + $0x30] sm:$0xff]
    %v86 = vld [vmem:[#allocation5 + $0x38] sm:$0xff]
    %v87 = vsub.f32 %v71, %v79
    %v88 = vsub.f32 %v72, %v80
    %v89 = vsub.f32 %v73, %v81
    %v90 = vsub.f32 %v74, %v82
    %v91 = vsub.f32 %v75, %v83
    %v92 = vsub.f32 %v76, %v84
    %v93 = vsub.f32 %v77, %v85
    %v94 = vsub.f32 %v78, %v86
    %vm95 = vcmask 130048
    %v96 = vsel %vm95, %v87, 0.0
    %v97 = vsel %vm95, %v89, 0.0
    %v98 = vadd.f32 %v96, %v97
    %v99 = vsel %vm95, %v91, 0.0
    %v100 = vadd.f32 %v98, %v99
    %v101 = vsel %vm95, %v93, 0.0
    %v102 = vadd.f32 %v100, %v101
    %v103 = vsel %vm95, %v88, 0.0
    %v104 = vsel %vm95, %v90, 0.0
    %v105 = vadd.f32 %v103, %v104
    %v106 = vsel %vm95, %v92, 0.0
    %v107 = vadd.f32 %v105, %v106
    %v108 = vsel %vm95, %v94, 0.0
    %v109 = vadd.f32 %v107, %v108
    %v110 = vrcp.pop 4.0
    %v111 = vmul.f32 %v102, %v110
    %v112 = vmul.f32 %v109, %v110
    %v114 = vsel %vm95, %v59, 0
    %116 = vmatprep.subr.mxu0 0.0
    %117 = vmatpush1.msra.mxu0 %v111
    %118 = vmatprep.subr.mxu0 0.0
    %119 = vmatpush1.msra.mxu0 %v112
    %120 = vmatprep.subr.mxu0 0.0
    %121 = vmatpush1.msra.mxu0 0.0
    %122 = vmatprep.subr.mxu0 0.0
    %123 = vmatpush1.msra.mxu0 0.0
    %124 = vmatprep.subr.mxu0 0.0
    %125 = vmatpush1.msra.mxu0 0.0
    %126 = vmatprep.subr.mxu0 0.0
    %127 = vmatpush1.msra.mxu0 0.0
    %128 = vmatprep.subr.mxu0 0.0
    %129 = vmatpush1.msra.mxu0 0.0
    %130 = vmatprep.subr.mxu0 0.0
    %131 = vmatpush1.msra.mxu0 0.0
    %132 = vmatprep.subr.mxu0 0.0
    %133 = vmatpush1.msra.mxu0 0.0
    %134 = vmatprep.subr.mxu0 0.0
    %135 = vmatpush1.msra.mxu0 0.0
    %136 = vmatprep.subr.mxu0 0.0
    %137 = vmatpush1.msra.mxu0 0.0
    %138 = vmatprep.subr.mxu0 0.0
    %139 = vmatpush1.msra.mxu0 0.0
    %140 = vmatprep.subr.mxu0 0.0
    %141 = vmatpush1.msra.mxu0 0.0
    %142 = vmatprep.subr.mxu0 0.0
    %143 = vmatpush1.msra.mxu0 0.0
    %144 = vmatprep.subr.mxu0 0.0
    %145 = vmatpush1.msra.mxu0 0.0
    %146 = vmatprep.subr.mxu0 0.0
    %147 = vmatpush1.msra.mxu0 0.0
    %148 = vmatprep.subr.mxu0 0.0
    %149 = vmatpush1.msra.mxu0 0.0
    %150 = vmatprep.subr.mxu0 0.0
    %151 = vmatpush1.msra.mxu0 0.0
    %152 = vmatprep.subr.mxu0 0.0
    %153 = vmatpush1.msra.mxu0 0.0
    %154 = vmatprep.subr.mxu0 0.0
    %155 = vmatpush1.msra.mxu0 0.0
    %156 = vmatprep.subr.mxu0 0.0
    %157 = vmatpush1.msra.mxu0 0.0
    %158 = vmatprep.subr.mxu0 0.0
    %159 = vmatpush1.msra.mxu0 0.0
    %160 = vmatprep.subr.mxu0 0.0
    %161 = vmatpush1.msra.mxu0 0.0
    %162 = vmatprep.subr.mxu0 0.0
    %163 = vmatpush1.msra.mxu0 0.0
    %164 = vmatprep.subr.mxu0 0.0
    %165 = vmatpush1.msra.mxu0 0.0
    %166 = vmatprep.subr.mxu0 0.0
    %167 = vmatpush1.msra.mxu0 0.0
    %168 = vmatprep.subr.mxu0 0.0
    %169 = vmatpush1.msra.mxu0 0.0
    %170 = vmatprep.subr.mxu0 0.0
    %171 = vmatpush1.msra.mxu0 0.0
    %172 = vmatprep.subr.mxu0 0.0
    %173 = vmatpush1.msra.mxu0 0.0
    %174 = vmatprep.subr.mxu0 0.0
    %175 = vmatpush1.msra.mxu0 0.0
    %176 = vmatprep.subr.mxu0 0.0
    %177 = vmatpush1.msra.mxu0 0.0
    %178 = vmatprep.subr.mxu0 0.0
    %179 = vmatpush1.msra.mxu0 0.0
    %180 = vmatprep.mubr.f32.mxu0 0.0
    %181 = vmatmul.mubr.f32.gmra.mrb[0].mxu0 %v114
    %v182 = vpop.f32.mrb[0].mxu0
    %v183 = vadd.f32 0.0, %v182
    %v184 = vpop.f32.mrb[0].mxu0
    %185 = vdwg.mxu0
    %v187 = vsel %vm95, %v183, 0
    %189 = vmatprep.subr.mxu0 0.0
    %190 = vmatpush1.msra.mxu0 %v69
    %191 = vmatprep.subr.mxu0 0.0
    %192 = vmatpush1.msra.mxu0 %v70
    %193 = vmatprep.subr.mxu0 0.0
    %194 = vmatpush1.msra.mxu0 0.0
    %195 = vmatprep.subr.mxu0 0.0
    %196 = vmatpush1.msra.mxu0 0.0
    %197 = vmatprep.subr.mxu0 0.0
    %198 = vmatpush1.msra.mxu0 0.0
    %199 = vmatprep.subr.mxu0 0.0
    %200 = vmatpush1.msra.mxu0 0.0
    %201 = vmatprep.subr.mxu0 0.0
    %202 = vmatpush1.msra.mxu0 0.0
    %203 = vmatprep.subr.mxu0 0.0
    %204 = vmatpush1.msra.mxu0 0.0
    %205 = vmatprep.subr.mxu0 0.0
    %206 = vmatpush1.msra.mxu0 0.0
    %207 = vmatprep.subr.mxu0 0.0
    %208 = vmatpush1.msra.mxu0 0.0
    %209 = vmatprep.subr.mxu0 0.0
    %210 = vmatpush1.msra.mxu0 0.0
    %211 = vmatprep.subr.mxu0 0.0
    %212 = vmatpush1.msra.mxu0 0.0
    %213 = vmatprep.subr.mxu0 0.0
    %214 = vmatpush1.msra.mxu0 0.0
    %215 = vmatprep.subr.mxu0 0.0
    %216 = vmatpush1.msra.mxu0 0.0
    %217 = vmatprep.subr.mxu0 0.0
    %218 = vmatpush1.msra.mxu0 0.0
    %219 = vmatprep.subr.mxu0 0.0
    %220 = vmatpush1.msra.mxu0 0.0
    %221 = vmatprep.subr.mxu0 0.0
    %222 = vmatpush1.msra.mxu0 0.0
    %223 = vmatprep.subr.mxu0 0.0
    %224 = vmatpush1.msra.mxu0 0.0
    %225 = vmatprep.subr.mxu0 0.0
    %226 = vmatpush1.msra.mxu0 0.0
    %227 = vmatprep.subr.mxu0 0.0
    %228 = vmatpush1.msra.mxu0 0.0
    %229 = vmatprep.subr.mxu0 0.0
    %230 = vmatpush1.msra.mxu0 0.0
    %231 = vmatprep.subr.mxu0 0.0
    %232 = vmatpush1.msra.mxu0 0.0
    %233 = vmatprep.subr.mxu0 0.0
    %234 = vmatpush1.msra.mxu0 0.0
    %235 = vmatprep.subr.mxu0 0.0
    %236 = vmatpush1.msra.mxu0 0.0
    %237 = vmatprep.subr.mxu0 0.0
    %238 = vmatpush1.msra.mxu0 0.0
    %239 = vmatprep.subr.mxu0 0.0
    %240 = vmatpush1.msra.mxu0 0.0
    %241 = vmatprep.subr.mxu0 0.0
    %242 = vmatpush1.msra.mxu0 0.0
    %243 = vmatprep.subr.mxu0 0.0
    %244 = vmatpush1.msra.mxu0 0.0
    %245 = vmatprep.subr.mxu0 0.0
    %246 = vmatpush1.msra.mxu0 0.0
    %247 = vmatprep.subr.mxu0 0.0
    %248 = vmatpush1.msra.mxu0 0.0
    %249 = vmatprep.subr.mxu0 0.0
    %250 = vmatpush1.msra.mxu0 0.0
    %251 = vmatprep.subr.mxu0 0.0
    %252 = vmatpush1.msra.mxu0 0.0
    %253 = vmatprep.mubr.f32.mxu0 0.0
    %254 = vmatmul.mubr.f32.gmra.mrb[0].mxu0 %v187
    %v255 = vpop.f32.mrb[0].mxu0
    %v256 = vadd.f32 0.0, %v255
    %v257 = vpop.f32.mrb[0].mxu0
    %258 = vdwg.mxu0
    %v259 = vld [vmem:[#allocation7] sm:$0xf]
    %v260 = vadd.f32 %v259, %v256
    %vm261 = vcmask 27648
    %262 = vst.msk [vmem:[#allocation7] sm:$0xf] %vm261, %v260
    %s263 = scalar_lea.vmem [#allocation2], 64
    %v264 = vld [vmem:[%s263] sm:$0xff]
    %v265 = vld [vmem:[%s263 + $0x8] sm:$0xff]
    %v266 = vld [vmem:[%s263 + $0x10] sm:$0xff]
    %v267 = vld [vmem:[%s263 + $0x18] sm:$0xff]
    %v268 = vld [vmem:[%s263 + $0x20] sm:$0xff]
    %v269 = vld [vmem:[%s263 + $0x28] sm:$0xff]
    %v270 = vld [vmem:[%s263 + $0x30] sm:$0xff]
    %v271 = vld [vmem:[%s263 + $0x38] sm:$0xff]
    %s272 = scalar_lea.vmem [#allocation5], 64
    %v273 = vld [vmem:[%s272] sm:$0xff]
    %v274 = vld [vmem:[%s272 + $0x8] sm:$0xff]
    %v275 = vld [vmem:[%s272 + $0x10] sm:$0xff]
    %v276 = vld [vmem:[%s272 + $0x18] sm:$0xff]
    %v277 = vld [vmem:[%s272 + $0x20] sm:$0xff]
    %v278 = vld [vmem:[%s272 + $0x28] sm:$0xff]
    %v279 = vld [vmem:[%s272 + $0x30] sm:$0xff]
    %v280 = vld [vmem:[%s272 + $0x38] sm:$0xff]
    %v281 = vsub.f32 %v264, %v273
    %v282 = vsub.f32 %v265, %v274
    %v283 = vsub.f32 %v266, %v275
    %v284 = vsub.f32 %v267, %v276
    %v285 = vsub.f32 %v268, %v277
    %v286 = vsub.f32 %v269, %v278
    %v287 = vsub.f32 %v270, %v279
    %v288 = vsub.f32 %v271, %v280
    %v289 = vsel %vm95, %v281, 0.0
    %v290 = vsel %vm95, %v283, 0.0
    %v291 = vadd.f32 %v289, %v290
    %v292 = vsel %vm95, %v285, 0.0
    %v293 = vadd.f32 %v291, %v292
    %v294 = vsel %vm95, %v287, 0.0
    %v295 = vadd.f32 %v293, %v294
    %v296 = vsel %vm95, %v282, 0.0
    %v297 = vsel %vm95, %v284, 0.0
    %v298 = vadd.f32 %v296, %v297
    %v299 = vsel %vm95, %v286, 0.0
    %v300 = vadd.f32 %v298, %v299
    %v301 = vsel %vm95, %v288, 0.0
    %v302 = vadd.f32 %v300, %v301
    %v303 = vmul.f32 %v295, %v110
    %v304 = vmul.f32 %v302, %v110
    %305 = vmatprep.subr.mxu0 0.0
    %306 = vmatpush1.msra.mxu0 %v303
    %307 = vmatprep.subr.mxu0 0.0
    %308 = vmatpush1.msra.mxu0 %v304
    %309 = vmatprep.subr.mxu0 0.0
    %310 = vmatpush1.msra.mxu0 0.0
    %311 = vmatprep.subr.mxu0 0.0
    %312 = vmatpush1.msra.mxu0 0.0
    %313 = vmatprep.subr.mxu0 0.0
    %314 = vmatpush1.msra.mxu0 0.0
    %315 = vmatprep.subr.mxu0 0.0
    %316 = vmatpush1.msra.mxu0 0.0
    %317 = vmatprep.subr.mxu0 0.0
    %318 = vmatpush1.msra.mxu0 0.0
    %319 = vmatprep.subr.mxu0 0.0
    %320 = vmatpush1.msra.mxu0 0.0
    %321 = vmatprep.subr.mxu0 0.0
    %322 = vmatpush1.msra.mxu0 0.0
    %323 = vmatprep.subr.mxu0 0.0
    %324 = vmatpush1.msra.mxu0 0.0
    %325 = vmatprep.subr.mxu0 0.0
    %326 = vmatpush1.msra.mxu0 0.0
    %327 = vmatprep.subr.mxu0 0.0
    %328 = vmatpush1.msra.mxu0 0.0
    %329 = vmatprep.subr.mxu0 0.0
    %330 = vmatpush1.msra.mxu0 0.0
    %331 = vmatprep.subr.mxu0 0.0
    %332 = vmatpush1.msra.mxu0 0.0
    %333 = vmatprep.subr.mxu0 0.0
    %334 = vmatpush1.msra.mxu0 0.0
    %335 = vmatprep.subr.mxu0 0.0
    %336 = vmatpush1.msra.mxu0 0.0
    %337 = vmatprep.subr.mxu0 0.0
    %338 = vmatpush1.msra.mxu0 0.0
    %339 = vmatprep.subr.mxu0 0.0
    %340 = vmatpush1.msra.mxu0 0.0
    %341 = vmatprep.subr.mxu0 0.0
    %342 = vmatpush1.msra.mxu0 0.0
    %343 = vmatprep.subr.mxu0 0.0
    %344 = vmatpush1.msra.mxu0 0.0
    %345 = vmatprep.subr.mxu0 0.0
    %346 = vmatpush1.msra.mxu0 0.0
    %347 = vmatprep.subr.mxu0 0.0
    %348 = vmatpush1.msra.mxu0 0.0
    %349 = vmatprep.subr.mxu0 0.0
    %350 = vmatpush1.msra.mxu0 0.0
    %351 = vmatprep.subr.mxu0 0.0
    %352 = vmatpush1.msra.mxu0 0.0
    %353 = vmatprep.subr.mxu0 0.0
    %354 = vmatpush1.msra.mxu0 0.0
    %355 = vmatprep.subr.mxu0 0.0
    %356 = vmatpush1.msra.mxu0 0.0
    %357 = vmatprep.subr.mxu0 0.0
    %358 = vmatpush1.msra.mxu0 0.0
    %359 = vmatprep.subr.mxu0 0.0
    %360 = vmatpush1.msra.mxu0 0.0
    %361 = vmatprep.subr.mxu0 0.0
    %362 = vmatpush1.msra.mxu0 0.0
    %363 = vmatprep.subr.mxu0 0.0
    %364 = vmatpush1.msra.mxu0 0.0
    %365 = vmatprep.subr.mxu0 0.0
    %366 = vmatpush1.msra.mxu0 0.0
    %367 = vmatprep.subr.mxu0 0.0
    %368 = vmatpush1.msra.mxu0 0.0
    %369 = vmatprep.mubr.f32.mxu0 0.0
    %370 = vmatmul.mubr.f32.gmra.mrb[0].mxu0 %v114
    %v371 = vpop.f32.mrb[0].mxu0
    %v372 = vadd.f32 0.0, %v371
    %v373 = vpop.f32.mrb[0].mxu0
    %374 = vdwg.mxu0
    %v376 = vsel %vm95, %v372, 0
    %378 = vmatprep.subr.mxu0 0.0
    %379 = vmatpush1.msra.mxu0 %v69
    %380 = vmatprep.subr.mxu0 0.0
    %381 = vmatpush1.msra.mxu0 %v70
    %382 = vmatprep.subr.mxu0 0.0
    %383 = vmatpush1.msra.mxu0 0.0
    %384 = vmatprep.subr.mxu0 0.0
    %385 = vmatpush1.msra.mxu0 0.0
    %386 = vmatprep.subr.mxu0 0.0
    %387 = vmatpush1.msra.mxu0 0.0
    %388 = vmatprep.subr.mxu0 0.0
    %389 = vmatpush1.msra.mxu0 0.0
    %390 = vmatprep.subr.mxu0 0.0
    %391 = vmatpush1.msra.mxu0 0.0
    %392 = vmatprep.subr.mxu0 0.0
    %393 = vmatpush1.msra.mxu0 0.0
    %394 = vmatprep.subr.mxu0 0.0
    %395 = vmatpush1.msra.mxu0 0.0
    %396 = vmatprep.subr.mxu0 0.0
    %397 = vmatpush1.msra.mxu0 0.0
    %398 = vmatprep.subr.mxu0 0.0
    %399 = vmatpush1.msra.mxu0 0.0
    %400 = vmatprep.subr.mxu0 0.0
    %401 = vmatpush1.msra.mxu0 0.0
    %402 = vmatprep.subr.mxu0 0.0
    %403 = vmatpush1.msra.mxu0 0.0
    %404 = vmatprep.subr.mxu0 0.0
    %405 = vmatpush1.msra.mxu0 0.0
    %406 = vmatprep.subr.mxu0 0.0
    %407 = vmatpush1.msra.mxu0 0.0
    %408 = vmatprep.subr.mxu0 0.0
    %409 = vmatpush1.msra.mxu0 0.0
    %410 = vmatprep.subr.mxu0 0.0
    %411 = vmatpush1.msra.mxu0 0.0
    %412 = vmatprep.subr.mxu0 0.0
    %413 = vmatpush1.msra.mxu0 0.0
    %414 = vmatprep.subr.mxu0 0.0
    %415 = vmatpush1.msra.mxu0 0.0
    %416 = vmatprep.subr.mxu0 0.0
    %417 = vmatpush1.msra.mxu0 0.0
    %418 = vmatprep.subr.mxu0 0.0
    %419 = vmatpush1.msra.mxu0 0.0
    %420 = vmatprep.subr.mxu0 0.0
    %421 = vmatpush1.msra.mxu0 0.0
    %422 = vmatprep.subr.mxu0 0.0
    %423 = vmatpush1.msra.mxu0 0.0
    %424 = vmatprep.subr.mxu0 0.0
    %425 = vmatpush1.msra.mxu0 0.0
    %426 = vmatprep.subr.mxu0 0.0
    %427 = vmatpush1.msra.mxu0 0.0
    %428 = vmatprep.subr.mxu0 0.0
    %429 = vmatpush1.msra.mxu0 0.0
    %430 = vmatprep.subr.mxu0 0.0
    %431 = vmatpush1.msra.mxu0 0.0
    %432 = vmatprep.subr.mxu0 0.0
    %433 = vmatpush1.msra.mxu0 0.0
    %434 = vmatprep.subr.mxu0 0.0
    %435 = vmatpush1.msra.mxu0 0.0
    %436 = vmatprep.subr.mxu0 0.0
    %437 = vmatpush1.msra.mxu0 0.0
    %438 = vmatprep.subr.mxu0 0.0
    %439 = vmatpush1.msra.mxu0 0.0
    %440 = vmatprep.subr.mxu0 0.0
    %441 = vmatpush1.msra.mxu0 0.0
    %442 = vmatprep.mubr.f32.mxu0 0.0
    %443 = vmatmul.mubr.f32.gmra.mrb[0].mxu0 %v376
    %v444 = vpop.f32.mrb[0].mxu0
    %v445 = vadd.f32 0.0, %v444
    %v446 = vpop.f32.mrb[0].mxu0
    %447 = vdwg.mxu0
    %s448 = scalar_lea.vmem [#allocation7], 4
    %v449 = vld [vmem:[%s448] sm:$0xf]
    %v450 = vadd.f32 %v449, %v445
    %451 = vst.msk [vmem:[%s448] sm:$0xf] %vm261, %v450
    // Predicated region
    $region22: #{tpu_custom_call.1} parent=1 // pred_check
      %p452 = pneg %p40
    $region23: #{tpu_custom_call.1} parent=1 // pred_check_branch
      %454 = sbr.rel (%p452) target = $region25
    $region24: #{tpu_custom_call.1} parent=1 // pred_region
      %v455 = vadd.s32 %v48, 1
      %vm456 = vcmp.eq.s32.totalorder %v455, %v50
      %v457 = vsel %vm456, 1.0, 0.0
      %v458 = vadd.s32 %v50, 1
      %vm459 = vcmp.eq.s32.totalorder %v48, %v458
      %v460 = vsel %vm459, 1.0, 0.0
      %v461 = vld [vmem:[#allocation7] sm:$0xf]
      %vm462 = vcmask 31744
      %v464 = vsel %vm462, %v461, 0
      %vm466 = vcmask 1043456
      %v468 = vsel %vm466, %v457, 0
      %470 = vmatprep.subr.mxu0 0.0
      %471 = vmatpush1.msra.mxu0 %v468
      %472 = vmatprep.subr.mxu0 0.0
      %473 = vmatpush1.msra.mxu0 0.0
      %474 = vmatprep.subr.mxu0 0.0
      %475 = vmatpush1.msra.mxu0 0.0
      %476 = vmatprep.subr.mxu0 0.0
      %477 = vmatpush1.msra.mxu0 0.0
      %478 = vmatprep.subr.mxu0 0.0
      %479 = vmatpush1.msra.mxu0 0.0
      %480 = vmatprep.subr.mxu0 0.0
      %481 = vmatpush1.msra.mxu0 0.0
      %482 = vmatprep.subr.mxu0 0.0
      %483 = vmatpush1.msra.mxu0 0.0
      %484 = vmatprep.subr.mxu0 0.0
      %485 = vmatpush1.msra.mxu0 0.0
      %486 = vmatprep.subr.mxu0 0.0
      %487 = vmatpush1.msra.mxu0 0.0
      %488 = vmatprep.subr.mxu0 0.0
      %489 = vmatpush1.msra.mxu0 0.0
      %490 = vmatprep.subr.mxu0 0.0
      %491 = vmatpush1.msra.mxu0 0.0
      %492 = vmatprep.subr.mxu0 0.0
      %493 = vmatpush1.msra.mxu0 0.0
      %494 = vmatprep.subr.mxu0 0.0
      %495 = vmatpush1.msra.mxu0 0.0
      %496 = vmatprep.subr.mxu0 0.0
      %497 = vmatpush1.msra.mxu0 0.0
      %498 = vmatprep.subr.mxu0 0.0
      %499 = vmatpush1.msra.mxu0 0.0
      %500 = vmatprep.subr.mxu0 0.0
      %501 = vmatpush1.msra.mxu0 0.0
      %502 = vmatprep.subr.mxu0 0.0
      %503 = vmatpush1.msra.mxu0 0.0
      %504 = vmatprep.subr.mxu0 0.0
      %505 = vmatpush1.msra.mxu0 0.0
      %506 = vmatprep.subr.mxu0 0.0
      %507 = vmatpush1.msra.mxu0 0.0
      %508 = vmatprep.subr.mxu0 0.0
      %509 = vmatpush1.msra.mxu0 0.0
      %510 = vmatprep.subr.mxu0 0.0
      %511 = vmatpush1.msra.mxu0 0.0
      %512 = vmatprep.subr.mxu0 0.0
      %513 = vmatpush1.msra.mxu0 0.0
      %514 = vmatprep.subr.mxu0 0.0
      %515 = vmatpush1.msra.mxu0 0.0
      %516 = vmatprep.subr.mxu0 0.0
      %517 = vmatpush1.msra.mxu0 0.0
      %518 = vmatprep.subr.mxu0 0.0
      %519 = vmatpush1.msra.mxu0 0.0
      %520 = vmatprep.subr.mxu0 0.0
      %521 = vmatpush1.msra.mxu0 0.0
      %522 = vmatprep.subr.mxu0 0.0
      %523 = vmatpush1.msra.mxu0 0.0
      %524 = vmatprep.subr.mxu0 0.0
      %525 = vmatpush1.msra.mxu0 0.0
      %526 = vmatprep.subr.mxu0 0.0
      %527 = vmatpush1.msra.mxu0 0.0
      %528 = vmatprep.subr.mxu0 0.0
      %529 = vmatpush1.msra.mxu0 0.0
      %530 = vmatprep.subr.mxu0 0.0
      %531 = vmatpush1.msra.mxu0 0.0
      %532 = vmatprep.subr.mxu0 0.0
      %533 = vmatpush1.msra.mxu0 0.0
      %534 = vmatprep.mubr.f32.mxu0 0.0
      %535 = vmatmul.mubr.f32.gmra.mrb[0].mxu0 %v464
      %v536 = vpop.f32.mrb[0].mxu0
      %v537 = vadd.f32 0.0, %v536
      %v538 = vpop.f32.mrb[0].mxu0
      %539 = vdwg.mxu0
      %v540 = vsub.f32 %v461, %v537
      %v542 = vsel %vm466, %v460, 0
      %544 = vmatprep.subr.mxu0 0.0
      %545 = vmatpush1.msra.mxu0 %v542
      %546 = vmatprep.subr.mxu0 0.0
      %547 = vmatpush1.msra.mxu0 0.0
      %548 = vmatprep.subr.mxu0 0.0
      %549 = vmatpush1.msra.mxu0 0.0
      %550 = vmatprep.subr.mxu0 0.0
      %551 = vmatpush1.msra.mxu0 0.0
      %552 = vmatprep.subr.mxu0 0.0
      %553 = vmatpush1.msra.mxu0 0.0
      %554 = vmatprep.subr.mxu0 0.0
      %555 = vmatpush1.msra.mxu0 0.0
      %556 = vmatprep.subr.mxu0 0.0
      %557 = vmatpush1.msra.mxu0 0.0
      %558 = vmatprep.subr.mxu0 0.0
      %559 = vmatpush1.msra.mxu0 0.0
      %560 = vmatprep.subr.mxu0 0.0
      %561 = vmatpush1.msra.mxu0 0.0
      %562 = vmatprep.subr.mxu0 0.0
      %563 = vmatpush1.msra.mxu0 0.0
      %564 = vmatprep.subr.mxu0 0.0
      %565 = vmatpush1.msra.mxu0 0.0
      %566 = vmatprep.subr.mxu0 0.0
      %567 = vmatpush1.msra.mxu0 0.0
      %568 = vmatprep.subr.mxu0 0.0
      %569 = vmatpush1.msra.mxu0 0.0
      %570 = vmatprep.subr.mxu0 0.0
      %571 = vmatpush1.msra.mxu0 0.0
      %572 = vmatprep.subr.mxu0 0.0
      %573 = vmatpush1.msra.mxu0 0.0
      %574 = vmatprep.subr.mxu0 0.0
      %575 = vmatpush1.msra.mxu0 0.0
      %576 = vmatprep.subr.mxu0 0.0
      %577 = vmatpush1.msra.mxu0 0.0
      %578 = vmatprep.subr.mxu0 0.0
      %579 = vmatpush1.msra.mxu0 0.0
      %580 = vmatprep.subr.mxu0 0.0
      %581 = vmatpush1.msra.mxu0 0.0
      %582 = vmatprep.subr.mxu0 0.0
      %583 = vmatpush1.msra.mxu0 0.0
      %584 = vmatprep.subr.mxu0 0.0
      %585 = vmatpush1.msra.mxu0 0.0
      %586 = vmatprep.subr.mxu0 0.0
      %587 = vmatpush1.msra.mxu0 0.0
      %588 = vmatprep.subr.mxu0 0.0
      %589 = vmatpush1.msra.mxu0 0.0
      %590 = vmatprep.subr.mxu0 0.0
      %591 = vmatpush1.msra.mxu0 0.0
      %592 = vmatprep.subr.mxu0 0.0
      %593 = vmatpush1.msra.mxu0 0.0
      %594 = vmatprep.subr.mxu0 0.0
      %595 = vmatpush1.msra.mxu0 0.0
      %596 = vmatprep.subr.mxu0 0.0
      %597 = vmatpush1.msra.mxu0 0.0
      %598 = vmatprep.subr.mxu0 0.0
      %599 = vmatpush1.msra.mxu0 0.0
      %600 = vmatprep.subr.mxu0 0.0
      %601 = vmatpush1.msra.mxu0 0.0
      %602 = vmatprep.subr.mxu0 0.0
      %603 = vmatpush1.msra.mxu0 0.0
      %604 = vmatprep.subr.mxu0 0.0
      %605 = vmatpush1.msra.mxu0 0.0
      %606 = vmatprep.subr.mxu0 0.0
      %607 = vmatpush1.msra.mxu0 0.0
      %608 = vmatprep.mubr.f32.mxu0 0.0
      %609 = vmatmul.mubr.f32.gmra.mrb[0].mxu0 %v464
      %v610 = vpop.f32.mrb[0].mxu0
      %v611 = vadd.f32 0.0, %v610
      %v612 = vpop.f32.mrb[0].mxu0
      %613 = vdwg.mxu0
      %v614 = vsub.f32 %v461, %v611
      %v615 = vsel %vm462, %v460, 0
      %v617 = vsel %vm466, %v461, 0
      %619 = vmatprep.subr.mxu0 0.0
      %620 = vmatpush1.msra.mxu0 %v617
      %621 = vmatprep.subr.mxu0 0.0
      %622 = vmatpush1.msra.mxu0 0.0
      %623 = vmatprep.subr.mxu0 0.0
      %624 = vmatpush1.msra.mxu0 0.0
      %625 = vmatprep.subr.mxu0 0.0
      %626 = vmatpush1.msra.mxu0 0.0
      %627 = vmatprep.subr.mxu0 0.0
      %628 = vmatpush1.msra.mxu0 0.0
      %629 = vmatprep.subr.mxu0 0.0
      %630 = vmatpush1.msra.mxu0 0.0
      %631 = vmatprep.subr.mxu0 0.0
      %632 = vmatpush1.msra.mxu0 0.0
      %633 = vmatprep.subr.mxu0 0.0
      %634 = vmatpush1.msra.mxu0 0.0
      %635 = vmatprep.subr.mxu0 0.0
      %636 = vmatpush1.msra.mxu0 0.0
      %637 = vmatprep.subr.mxu0 0.0
      %638 = vmatpush1.msra.mxu0 0.0
      %639 = vmatprep.subr.mxu0 0.0
      %640 = vmatpush1.msra.mxu0 0.0
      %641 = vmatprep.subr.mxu0 0.0
      %642 = vmatpush1.msra.mxu0 0.0
      %643 = vmatprep.subr.mxu0 0.0
      %644 = vmatpush1.msra.mxu0 0.0
      %645 = vmatprep.subr.mxu0 0.0
      %646 = vmatpush1.msra.mxu0 0.0
      %647 = vmatprep.subr.mxu0 0.0
      %648 = vmatpush1.msra.mxu0 0.0
      %649 = vmatprep.subr.mxu0 0.0
      %650 = vmatpush1.msra.mxu0 0.0
      %651 = vmatprep.subr.mxu0 0.0
      %652 = vmatpush1.msra.mxu0 0.0
      %653 = vmatprep.subr.mxu0 0.0
      %654 = vmatpush1.msra.mxu0 0.0
      %655 = vmatprep.subr.mxu0 0.0
      %656 = vmatpush1.msra.mxu0 0.0
      %657 = vmatprep.subr.mxu0 0.0
      %658 = vmatpush1.msra.mxu0 0.0
      %659 = vmatprep.subr.mxu0 0.0
      %660 = vmatpush1.msra.mxu0 0.0
      %661 = vmatprep.subr.mxu0 0.0
      %662 = vmatpush1.msra.mxu0 0.0
      %663 = vmatprep.subr.mxu0 0.0
      %664 = vmatpush1.msra.mxu0 0.0
      %665 = vmatprep.subr.mxu0 0.0
      %666 = vmatpush1.msra.mxu0 0.0
      %667 = vmatprep.subr.mxu0 0.0
      %668 = vmatpush1.msra.mxu0 0.0
      %669 = vmatprep.subr.mxu0 0.0
      %670 = vmatpush1.msra.mxu0 0.0
      %671 = vmatprep.subr.mxu0 0.0
      %672 = vmatpush1.msra.mxu0 0.0
      %673 = vmatprep.subr.mxu0 0.0
      %674 = vmatpush1.msra.mxu0 0.0
      %675 = vmatprep.subr.mxu0 0.0
      %676 = vmatpush1.msra.mxu0 0.0
      %677 = vmatprep.subr.mxu0 0.0
      %678 = vmatpush1.msra.mxu0 0.0
      %679 = vmatprep.subr.mxu0 0.0
      %680 = vmatpush1.msra.mxu0 0.0
      %681 = vmatprep.subr.mxu0 0.0
      %682 = vmatpush1.msra.mxu0 0.0
      %683 = vmatprep.mubr.f32.mxu0 0.0
      %684 = vmatmul.mubr.f32.gmra.mrb[0].mxu0 %v615
      %v685 = vpop.f32.mrb[0].mxu0
      %v686 = vadd.f32 0.0, %v685
      %v687 = vpop.f32.mrb[0].mxu0
      %688 = vdwg.mxu0
      %v689 = vsub.f32 %v461, %v686
      %v690 = vsel %vm462, %v457, 0
      %692 = vmatprep.subr.mxu0 0.0
      %693 = vmatpush1.msra.mxu0 %v617
      %694 = vmatprep.subr.mxu0 0.0
      %695 = vmatpush1.msra.mxu0 0.0
      %696 = vmatprep.subr.mxu0 0.0
      %697 = vmatpush1.msra.mxu0 0.0
      %698 = vmatprep.subr.mxu0 0.0
      %699 = vmatpush1.msra.mxu0 0.0
      %700 = vmatprep.subr.mxu0 0.0
      %701 = vmatpush1.msra.mxu0 0.0
      %702 = vmatprep.subr.mxu0 0.0
      %703 = vmatpush1.msra.mxu0 0.0
      %704 = vmatprep.subr.mxu0 0.0
      %705 = vmatpush1.msra.mxu0 0.0
      %706 = vmatprep.subr.mxu0 0.0
      %707 = vmatpush1.msra.mxu0 0.0
      %708 = vmatprep.subr.mxu0 0.0
      %709 = vmatpush1.msra.mxu0 0.0
      %710 = vmatprep.subr.mxu0 0.0
      %711 = vmatpush1.msra.mxu0 0.0
      %712 = vmatprep.subr.mxu0 0.0
      %713 = vmatpush1.msra.mxu0 0.0
      %714 = vmatprep.subr.mxu0 0.0
      %715 = vmatpush1.msra.mxu0 0.0
      %716 = vmatprep.subr.mxu0 0.0
      %717 = vmatpush1.msra.mxu0 0.0
      %718 = vmatprep.subr.mxu0 0.0
      %719 = vmatpush1.msra.mxu0 0.0
      %720 = vmatprep.subr.mxu0 0.0
      %721 = vmatpush1.msra.mxu0 0.0
      %722 = vmatprep.subr.mxu0 0.0
      %723 = vmatpush1.msra.mxu0 0.0
      %724 = vmatprep.subr.mxu0 0.0
      %725 = vmatpush1.msra.mxu0 0.0
      %726 = vmatprep.subr.mxu0 0.0
      %727 = vmatpush1.msra.mxu0 0.0
      %728 = vmatprep.subr.mxu0 0.0
      %729 = vmatpush1.msra.mxu0 0.0
      %730 = vmatprep.subr.mxu0 0.0
      %731 = vmatpush1.msra.mxu0 0.0
      %732 = vmatprep.subr.mxu0 0.0
      %733 = vmatpush1.msra.mxu0 0.0
      %734 = vmatprep.subr.mxu0 0.0
      %735 = vmatpush1.msra.mxu0 0.0
      %736 = vmatprep.subr.mxu0 0.0
      %737 = vmatpush1.msra.mxu0 0.0
      %738 = vmatprep.subr.mxu0 0.0
      %739 = vmatpush1.msra.mxu0 0.0
      %740 = vmatprep.subr.mxu0 0.0
      %741 = vmatpush1.msra.mxu0 0.0
      %742 = vmatprep.subr.mxu0 0.0
      %743 = vmatpush1.msra.mxu0 0.0
      %744 = vmatprep.subr.mxu0 0.0
      %745 = vmatpush1.msra.mxu0 0.0
      %746 = vmatprep.subr.mxu0 0.0
      %747 = vmatpush1.msra.mxu0 0.0
      %748 = vmatprep.subr.mxu0 0.0
      %749 = vmatpush1.msra.mxu0 0.0
      %750 = vmatprep.subr.mxu0 0.0
      %751 = vmatpush1.msra.mxu0 0.0
      %752 = vmatprep.subr.mxu0 0.0
      %753 = vmatpush1.msra.mxu0 0.0
      %754 = vmatprep.subr.mxu0 0.0
      %755 = vmatpush1.msra.mxu0 0.0
      %756 = vmatprep.mubr.f32.mxu0 0.0
      %757 = vmatmul.mubr.f32.gmra.mrb[0].mxu0 %v690
      %v758 = vpop.f32.mrb[0].mxu0
      %v759 = vadd.f32 0.0, %v758
      %v760 = vpop.f32.mrb[0].mxu0
      %761 = vdwg.mxu0
      %v762 = vsub.f32 %v461, %v759
      %v763 = vmul.f32 %v540, %v540
      %v764 = vmul.f32 %v614, %v614
      %v765 = vadd.f32 %v763, %v764
      %v766 = vmul.f32 %v689, %v689
      %v767 = vadd.f32 %v765, %v766
      %v768 = vmul.f32 %v762, %v762
      %v769 = vadd.f32 %v767, %v768
      %770 = vst.msk [vmem:[#allocation7] sm:$0xf] %vm261, %v769
      %v771 = vld [vmem:[%s448] sm:$0xf]
      %v773 = vsel %vm462, %v771, 0
      %775 = vmatprep.subr.mxu0 0.0
      %776 = vmatpush1.msra.mxu0 %v468
      %777 = vmatprep.subr.mxu0 0.0
      %778 = vmatpush1.msra.mxu0 0.0
      %779 = vmatprep.subr.mxu0 0.0
      %780 = vmatpush1.msra.mxu0 0.0
      %781 = vmatprep.subr.mxu0 0.0
      %782 = vmatpush1.msra.mxu0 0.0
      %783 = vmatprep.subr.mxu0 0.0
      %784 = vmatpush1.msra.mxu0 0.0
      %785 = vmatprep.subr.mxu0 0.0
      %786 = vmatpush1.msra.mxu0 0.0
      %787 = vmatprep.subr.mxu0 0.0
      %788 = vmatpush1.msra.mxu0 0.0
      %789 = vmatprep.subr.mxu0 0.0
      %790 = vmatpush1.msra.mxu0 0.0
      %791 = vmatprep.subr.mxu0 0.0
      %792 = vmatpush1.msra.mxu0 0.0
      %793 = vmatprep.subr.mxu0 0.0
      %794 = vmatpush1.msra.mxu0 0.0
      %795 = vmatprep.subr.mxu0 0.0
      %796 = vmatpush1.msra.mxu0 0.0
      %797 = vmatprep.subr.mxu0 0.0
      %798 = vmatpush1.msra.mxu0 0.0
      %799 = vmatprep.subr.mxu0 0.0
      %800 = vmatpush1.msra.mxu0 0.0
      %801 = vmatprep.subr.mxu0 0.0
      %802 = vmatpush1.msra.mxu0 0.0
      %803 = vmatprep.subr.mxu0 0.0
      %804 = vmatpush1.msra.mxu0 0.0
      %805 = vmatprep.subr.mxu0 0.0
      %806 = vmatpush1.msra.mxu0 0.0
      %807 = vmatprep.subr.mxu0 0.0
      %808 = vmatpush1.msra.mxu0 0.0
      %809 = vmatprep.subr.mxu0 0.0
      %810 = vmatpush1.msra.mxu0 0.0
      %811 = vmatprep.subr.mxu0 0.0
      %812 = vmatpush1.msra.mxu0 0.0
      %813 = vmatprep.subr.mxu0 0.0
      %814 = vmatpush1.msra.mxu0 0.0
      %815 = vmatprep.subr.mxu0 0.0
      %816 = vmatpush1.msra.mxu0 0.0
      %817 = vmatprep.subr.mxu0 0.0
      %818 = vmatpush1.msra.mxu0 0.0
      %819 = vmatprep.subr.mxu0 0.0
      %820 = vmatpush1.msra.mxu0 0.0
      %821 = vmatprep.subr.mxu0 0.0
      %822 = vmatpush1.msra.mxu0 0.0
      %823 = vmatprep.subr.mxu0 0.0
      %824 = vmatpush1.msra.mxu0 0.0
      %825 = vmatprep.subr.mxu0 0.0
      %826 = vmatpush1.msra.mxu0 0.0
      %827 = vmatprep.subr.mxu0 0.0
      %828 = vmatpush1.msra.mxu0 0.0
      %829 = vmatprep.subr.mxu0 0.0
      %830 = vmatpush1.msra.mxu0 0.0
      %831 = vmatprep.subr.mxu0 0.0
      %832 = vmatpush1.msra.mxu0 0.0
      %833 = vmatprep.subr.mxu0 0.0
      %834 = vmatpush1.msra.mxu0 0.0
      %835 = vmatprep.subr.mxu0 0.0
      %836 = vmatpush1.msra.mxu0 0.0
      %837 = vmatprep.subr.mxu0 0.0
      %838 = vmatpush1.msra.mxu0 0.0
      %839 = vmatprep.mubr.f32.mxu0 0.0
      %840 = vmatmul.mubr.f32.gmra.mrb[0].mxu0 %v773
      %v841 = vpop.f32.mrb[0].mxu0
      %v842 = vadd.f32 0.0, %v841
      %v843 = vpop.f32.mrb[0].mxu0
      %844 = vdwg.mxu0
      %v845 = vsub.f32 %v771, %v842
      %846 = vmatprep.subr.mxu0 0.0
      %847 = vmatpush1.msra.mxu0 %v542
      %848 = vmatprep.subr.mxu0 0.0
      %849 = vmatpush1.msra.mxu0 0.0
      %850 = vmatprep.subr.mxu0 0.0
      %851 = vmatpush1.msra.mxu0 0.0
      %852 = vmatprep.subr.mxu0 0.0
      %853 = vmatpush1.msra.mxu0 0.0
      %854 = vmatprep.subr.mxu0 0.0
      %855 = vmatpush1.msra.mxu0 0.0
      %856 = vmatprep.subr.mxu0 0.0
      %857 = vmatpush1.msra.mxu0 0.0
      %858 = vmatprep.subr.mxu0 0.0
      %859 = vmatpush1.msra.mxu0 0.0
      %860 = vmatprep.subr.mxu0 0.0
      %861 = vmatpush1.msra.mxu0 0.0
      %862 = vmatprep.subr.mxu0 0.0
      %863 = vmatpush1.msra.mxu0 0.0
      %864 = vmatprep.subr.mxu0 0.0
      %865 = vmatpush1.msra.mxu0 0.0
      %866 = vmatprep.subr.mxu0 0.0
      %867 = vmatpush1.msra.mxu0 0.0
      %868 = vmatprep.subr.mxu0 0.0
      %869 = vmatpush1.msra.mxu0 0.0
      %870 = vmatprep.subr.mxu0 0.0
      %871 = vmatpush1.msra.mxu0 0.0
      %872 = vmatprep.subr.mxu0 0.0
      %873 = vmatpush1.msra.mxu0 0.0
      %874 = vmatprep.subr.mxu0 0.0
      %875 = vmatpush1.msra.mxu0 0.0
      %876 = vmatprep.subr.mxu0 0.0
      %877 = vmatpush1.msra.mxu0 0.0
      %878 = vmatprep.subr.mxu0 0.0
      %879 = vmatpush1.msra.mxu0 0.0
      %880 = vmatprep.subr.mxu0 0.0
      %881 = vmatpush1.msra.mxu0 0.0
      %882 = vmatprep.subr.mxu0 0.0
      %883 = vmatpush1.msra.mxu0 0.0
      %884 = vmatprep.subr.mxu0 0.0
      %885 = vmatpush1.msra.mxu0 0.0
      %886 = vmatprep.subr.mxu0 0.0
      %887 = vmatpush1.msra.mxu0 0.0
      %888 = vmatprep.subr.mxu0 0.0
      %889 = vmatpush1.msra.mxu0 0.0
      %890 = vmatprep.subr.mxu0 0.0
      %891 = vmatpush1.msra.mxu0 0.0
      %892 = vmatprep.subr.mxu0 0.0
      %893 = vmatpush1.msra.mxu0 0.0
      %894 = vmatprep.subr.mxu0 0.0
      %895 = vmatpush1.msra.mxu0 0.0
      %896 = vmatprep.subr.mxu0 0.0
      %897 = vmatpush1.msra.mxu0 0.0
      %898 = vmatprep.subr.mxu0 0.0
      %899 = vmatpush1.msra.mxu0 0.0
      %900 = vmatprep.subr.mxu0 0.0
      %901 = vmatpush1.msra.mxu0 0.0
      %902 = vmatprep.subr.mxu0 0.0
      %903 = vmatpush1.msra.mxu0 0.0
      %904 = vmatprep.subr.mxu0 0.0
      %905 = vmatpush1.msra.mxu0 0.0
      %906 = vmatprep.subr.mxu0 0.0
      %907 = vmatpush1.msra.mxu0 0.0
      %908 = vmatprep.subr.mxu0 0.0
      %909 = vmatpush1.msra.mxu0 0.0
      %910 = vmatprep.mubr.f32.mxu0 0.0
      %911 = vmatmul.mubr.f32.gmra.mrb[0].mxu0 %v773
      %v912 = vpop.f32.mrb[0].mxu0
      %v913 = vadd.f32 0.0, %v912
      %v914 = vpop.f32.mrb[0].mxu0
      %915 = vdwg.mxu0
      %v916 = vsub.f32 %v771, %v913
      %v917 = vsel %vm466, %v771, 0
      %919 = vmatprep.subr.mxu0 0.0
      %920 = vmatpush1.msra.mxu0 %v917
      %921 = vmatprep.subr.mxu0 0.0
      %922 = vmatpush1.msra.mxu0 0.0
      %923 = vmatprep.subr.mxu0 0.0
      %924 = vmatpush1.msra.mxu0 0.0
      %925 = vmatprep.subr.mxu0 0.0
      %926 = vmatpush1.msra.mxu0 0.0
      %927 = vmatprep.subr.mxu0 0.0
      %928 = vmatpush1.msra.mxu0 0.0
      %929 = vmatprep.subr.mxu0 0.0
      %930 = vmatpush1.msra.mxu0 0.0
      %931 = vmatprep.subr.mxu0 0.0
      %932 = vmatpush1.msra.mxu0 0.0
      %933 = vmatprep.subr.mxu0 0.0
      %934 = vmatpush1.msra.mxu0 0.0
      %935 = vmatprep.subr.mxu0 0.0
      %936 = vmatpush1.msra.mxu0 0.0
      %937 = vmatprep.subr.mxu0 0.0
      %938 = vmatpush1.msra.mxu0 0.0
      %939 = vmatprep.subr.mxu0 0.0
      %940 = vmatpush1.msra.mxu0 0.0
      %941 = vmatprep.subr.mxu0 0.0
      %942 = vmatpush1.msra.mxu0 0.0
      %943 = vmatprep.subr.mxu0 0.0
      %944 = vmatpush1.msra.mxu0 0.0
      %945 = vmatprep.subr.mxu0 0.0
      %946 = vmatpush1.msra.mxu0 0.0
      %947 = vmatprep.subr.mxu0 0.0
      %948 = vmatpush1.msra.mxu0 0.0
      %949 = vmatprep.subr.mxu0 0.0
      %950 = vmatpush1.msra.mxu0 0.0
      %951 = vmatprep.subr.mxu0 0.0
      %952 = vmatpush1.msra.mxu0 0.0
      %953 = vmatprep.subr.mxu0 0.0
      %954 = vmatpush1.msra.mxu0 0.0
      %955 = vmatprep.subr.mxu0 0.0
      %956 = vmatpush1.msra.mxu0 0.0
      %957 = vmatprep.subr.mxu0 0.0
      %958 = vmatpush1.msra.mxu0 0.0
      %959 = vmatprep.subr.mxu0 0.0
      %960 = vmatpush1.msra.mxu0 0.0
      %961 = vmatprep.subr.mxu0 0.0
      %962 = vmatpush1.msra.mxu0 0.0
      %963 = vmatprep.subr.mxu0 0.0
      %964 = vmatpush1.msra.mxu0 0.0
      %965 = vmatprep.subr.mxu0 0.0
      %966 = vmatpush1.msra.mxu0 0.0
      %967 = vmatprep.subr.mxu0 0.0
      %968 = vmatpush1.msra.mxu0 0.0
      %969 = vmatprep.subr.mxu0 0.0
      %970 = vmatpush1.msra.mxu0 0.0
      %971 = vmatprep.subr.mxu0 0.0
      %972 = vmatpush1.msra.mxu0 0.0
      %973 = vmatprep.subr.mxu0 0.0
      %974 = vmatpush1.msra.mxu0 0.0
      %975 = vmatprep.subr.mxu0 0.0
      %976 = vmatpush1.msra.mxu0 0.0
      %977 = vmatprep.subr.mxu0 0.0
      %978 = vmatpush1.msra.mxu0 0.0
      %979 = vmatprep.subr.mxu0 0.0
      %980 = vmatpush1.msra.mxu0 0.0
      %981 = vmatprep.subr.mxu0 0.0
      %982 = vmatpush1.msra.mxu0 0.0
      %983 = vmatprep.mubr.f32.mxu0 0.0
      %984 = vmatmul.mubr.f32.gmra.mrb[0].mxu0 %v615
      %v985 = vpop.f32.mrb[0].mxu0
      %v986 = vadd.f32 0.0, %v985
      %v987 = vpop.f32.mrb[0].mxu0
      %988 = vdwg.mxu0
      %v989 = vsub.f32 %v771, %v986
      %990 = vmatprep.subr.mxu0 0.0
      %991 = vmatpush1.msra.mxu0 %v917
      %992 = vmatprep.subr.mxu0 0.0
      %993 = vmatpush1.msra.mxu0 0.0
      %994 = vmatprep.subr.mxu0 0.0
      %995 = vmatpush1.msra.mxu0 0.0
      %996 = vmatprep.subr.mxu0 0.0
      %997 = vmatpush1.msra.mxu0 0.0
      %998 = vmatprep.subr.mxu0 0.0
      %999 = vmatpush1.msra.mxu0 0.0
      %1000 = vmatprep.subr.mxu0 0.0
      %1001 = vmatpush1.msra.mxu0 0.0
      %1002 = vmatprep.subr.mxu0 0.0
      %1003 = vmatpush1.msra.mxu0 0.0
      %1004 = vmatprep.subr.mxu0 0.0
      %1005 = vmatpush1.msra.mxu0 0.0
      %1006 = vmatprep.subr.mxu0 0.0
      %1007 = vmatpush1.msra.mxu0 0.0
      %1008 = vmatprep.subr.mxu0 0.0
      %1009 = vmatpush1.msra.mxu0 0.0
      %1010 = vmatprep.subr.mxu0 0.0
      %1011 = vmatpush1.msra.mxu0 0.0
      %1012 = vmatprep.subr.mxu0 0.0
      %1013 = vmatpush1.msra.mxu0 0.0
      %1014 = vmatprep.subr.mxu0 0.0
      %1015 = vmatpush1.msra.mxu0 0.0
      %1016 = vmatprep.subr.mxu0 0.0
      %1017 = vmatpush1.msra.mxu0 0.0
      %1018 = vmatprep.subr.mxu0 0.0
      %1019 = vmatpush1.msra.mxu0 0.0
      %1020 = vmatprep.subr.mxu0 0.0
      %1021 = vmatpush1.msra.mxu0 0.0
      %1022 = vmatprep.subr.mxu0 0.0
      %1023 = vmatpush1.msra.mxu0 0.0
      %1024 = vmatprep.subr.mxu0 0.0
      %1025 = vmatpush1.msra.mxu0 0.0
      %1026 = vmatprep.subr.mxu0 0.0
      %1027 = vmatpush1.msra.mxu0 0.0
      %1028 = vmatprep.subr.mxu0 0.0
      %1029 = vmatpush1.msra.mxu0 0.0
      %1030 = vmatprep.subr.mxu0 0.0
      %1031 = vmatpush1.msra.mxu0 0.0
      %1032 = vmatprep.subr.mxu0 0.0
      %1033 = vmatpush1.msra.mxu0 0.0
      %1034 = vmatprep.subr.mxu0 0.0
      %1035 = vmatpush1.msra.mxu0 0.0
      %1036 = vmatprep.subr.mxu0 0.0
      %1037 = vmatpush1.msra.mxu0 0.0
      %1038 = vmatprep.subr.mxu0 0.0
      %1039 = vmatpush1.msra.mxu0 0.0
      %1040 = vmatprep.subr.mxu0 0.0
      %1041 = vmatpush1.msra.mxu0 0.0
      %1042 = vmatprep.subr.mxu0 0.0
      %1043 = vmatpush1.msra.mxu0 0.0
      %1044 = vmatprep.subr.mxu0 0.0
      %1045 = vmatpush1.msra.mxu0 0.0
      %1046 = vmatprep.subr.mxu0 0.0
      %1047 = vmatpush1.msra.mxu0 0.0
      %1048 = vmatprep.subr.mxu0 0.0
      %1049 = vmatpush1.msra.mxu0 0.0
      %1050 = vmatprep.subr.mxu0 0.0
      %1051 = vmatpush1.msra.mxu0 0.0
      %1052 = vmatprep.subr.mxu0 0.0
      %1053 = vmatpush1.msra.mxu0 0.0
      %1054 = vmatprep.mubr.f32.mxu0 0.0
      %1055 = vmatmul.mubr.f32.gmra.mrb[0].mxu0 %v690
      %v1056 = vpop.f32.mrb[0].mxu0
      %v1057 = vadd.f32 0.0, %v1056
      %v1058 = vpop.f32.mrb[0].mxu0
      %1059 = vdwg.mxu0
      %v1060 = vsub.f32 %v771, %v1057
      %v1061 = vmul.f32 %v845, %v845
      %v1062 = vmul.f32 %v916, %v916
      %v1063 = vadd.f32 %v1061, %v1062
      %v1064 = vmul.f32 %v989, %v989
      %v1065 = vadd.f32 %v1063, %v1064
      %v1066 = vmul.f32 %v1060, %v1060
      %v1067 = vadd.f32 %v1065, %v1066
      %1068 = vst.msk [vmem:[%s448] sm:$0xf] %vm261, %v1067
    $region25: #{tpu_custom_call.1} parent=1 // pred_fallthru
      _
    // Predicated region
    $region26: #{tpu_custom_call.1} parent=1 // pred_check
      _
    $region27: #{tpu_custom_call.1} parent=1 // pred_check_branch
      %1070 = sbr.rel (0) target = $region29
    $region28: #{tpu_custom_call.1} parent=1 // pred_region
      %s1072 = ssub.s32 128, 128
      %1073 = vsyncadd [#allocation4], %s1072
      %s1074 = sshll.u32 [#allocation7], 4
      %s1075 = int_to_ptr.vmem [resolvable:$true] %s1074
      %1080 = dma.vmem_to_hbm [thread:$0]  %s1075, 128, %s2, [#allocation4], 64, 64, 4
    $region29: #{tpu_custom_call.1} parent=1 // pred_fallthru
      _
    // Predicated region
    $region30: #{tpu_custom_call.1} parent=1 // pred_check
      _
    $region31: #{tpu_custom_call.1} parent=1 // pred_check_branch
      %1082 = sbr.rel (0) target = $region33
    $region32: #{tpu_custom_call.1} parent=1 // pred_region
      %1083 = dma.done [#allocation4], 128
    $region33: #{tpu_custom_call.1} parent=1 // pred_fallthru
      _
    %1084 = vsyncpa [#allocation3], 1
    %1085 = vsyncpa [#allocation6], 1
    %1086 = vsyncpa [#allocation4], 1

</llo_original>
